<compile_context>
chip_gen: v5e
topology: v5e:2x2
jax: 0.10.0
libtpu: 0.0.40
codegen_flags: <defaults>
</compile_context>

<pallas_src>
import functools

import jax
import jax.numpy as jnp
from jax.experimental import pallas as pl
from jax.experimental.pallas import tpu as pltpu


def _dual_conv3x3_act_add_kernel(xp_ref, w_ref, b_ref, o_ref):
    # xp_ref: (27, TM) im2col patches (lane-dense along pixels)
    # w_ref : (32, 27)  rows 0..15 = conv1 weights, rows 16..31 = conv2 weights
    # b_ref : (32, 1)
    # o_ref : (16, TM)
    y = jnp.dot(w_ref[...], xp_ref[...], preferred_element_type=jnp.float32)
    y = y + b_ref[...]                       # broadcast bias over the lane (pixel) axis
    y1 = y[0:16, :]                          # conv1 pre-activation (tile-aligned sublane slice)
    y2 = y[16:32, :]                         # conv2 pre-activation
    relu6 = jnp.clip(y1, 0.0, 6.0)           # ReLU6 on VPU
    sig = 1.0 / (1.0 + jnp.exp(-y2))         # Sigmoid via EUP exp + divide
    o_ref[...] = (relu6 + sig).astype(o_ref.dtype)


def _round_up(a, b):
    return ((a + b - 1) // b) * b


@functools.partial(jax.jit, static_argnames=("tm",))
def testblock5_forward(x_nchw, w1, b1, w2, b2, *, tm=1024):
    """x_nchw: (N, 3, H, W); w1/w2: (16, 3, 3, 3); b1/b2: (16,).

    Returns (N, 16, H-2, W-2) float32, matching TestBlock5.forward.
    """
    N, Cin, H, W = x_nchw.shape
    KH = KW = 3
    Cout = w1.shape[0]
    Ho, Wo = H - KH + 1, W - KW + 1
    M = N * Ho * Wo
    K = Cin * KH * KW                                        # 27

    # im2col, channels-major: patches[p, m] with p = c*9 + dy*3 + dx,
    # m = flatten(n, y, x).  Big pixel axis lands in the lane dimension.
    planes = []
    for c in range(Cin):
        for dy in range(KH):
            for dx in range(KW):
                planes.append(x_nchw[:, c, dy:dy + Ho, dx:dx + Wo])
    xp = jnp.stack(planes, axis=0).reshape(K, M)             # (27, M)

    # Fuse both convs into one weight/bias stack.  PyTorch weight layout
    # (Cout, Cin, kh, kw) flattens exactly to the p = c*9 + dy*3 + dx order.
    w_all = jnp.concatenate([w1.reshape(Cout, K), w2.reshape(Cout, K)], axis=0)  # (32, 27)
    b_all = jnp.concatenate([b1, b2], axis=0).reshape(2 * Cout, 1)               # (32, 1)

    # Lane-dense tiling over pixels; pad M so every block is a full 128-multiple.
    tm_eff = min(tm, _round_up(M, 128))
    M_pad = _round_up(M, tm_eff)
    if M_pad != M:
        xp = jnp.pad(xp, ((0, 0), (0, M_pad - M)))

    out_flat = pl.pallas_call(
        _dual_conv3x3_act_add_kernel,
        out_shape=jax.ShapeDtypeStruct((Cout, M_pad), jnp.float32),
        grid=(M_pad // tm_eff,),
        in_specs=[
            pl.BlockSpec((K, tm_eff), lambda i: (0, i)),          # patch tile (lane-dense)
            pl.BlockSpec((2 * Cout, K), lambda i: (0, 0)),        # full stacked weights
            pl.BlockSpec((2 * Cout, 1), lambda i: (0, 0)),        # full stacked biases
        ],
        out_specs=pl.BlockSpec((Cout, tm_eff), lambda i: (0, i)),  # lane-dense output tile
        compiler_params=pltpu.CompilerParams(
            dimension_semantics=("parallel",)),
    )(xp, w_all, b_all)

    out = out_flat[:, :M].reshape(Cout, N, Ho, Wo)
    return jnp.transpose(out, (1, 0, 2, 3))                  # back to NCHW


if __name__ == "__main__":
    key = jax.random.PRNGKey(0)
    k_x, k_w1, k_b1, k_w2, k_b2 = jax.random.split(key, 5)

    N, Cin, H, W = 2, 3, 16, 16
    Cout = 16

    x = jax.random.normal(k_x, (N, Cin, H, W), dtype=jnp.float32)
    # Deterministic synthetic parameters (same shapes as nn.Conv2d(3, 16, 3)).
    w1 = jax.random.normal(k_w1, (Cout, Cin, 3, 3), dtype=jnp.float32) * 0.1
    b1 = jax.random.normal(k_b1, (Cout,), dtype=jnp.float32) * 0.1
    w2 = jax.random.normal(k_w2, (Cout, Cin, 3, 3), dtype=jnp.float32) * 0.1
    b2 = jax.random.normal(k_b2, (Cout,), dtype=jnp.float32) * 0.1

    out = testblock5_forward(x, w1, b1, w2, b2)
    jax.block_until_ready(out)

    # Pure-JAX reference: ReLU6(conv1(x)) + Sigmoid(conv2(x)).
    dn = ("NCHW", "OIHW", "NCHW")
    y1 = jax.lax.conv_general_dilated(x, w1, (1, 1), "VALID", dimension_numbers=dn)
    y1 = y1 + b1[None, :, None, None]
    y2 = jax.lax.conv_general_dilated(x, w2, (1, 1), "VALID", dimension_numbers=dn)
    y2 = y2 + b2[None, :, None, None]
    ref = jnp.clip(y1, 0.0, 6.0) + 1.0 / (1.0 + jnp.exp(-y2))

    assert out.shape == (N, Cout, H - 2, W - 2), out.shape
    assert jnp.allclose(out, ref, atol=1e-4, rtol=1e-4), float(jnp.max(jnp.abs(out - ref)))

    print("KERNEL_OK")
</pallas_src>

<mosaic_0001>
module attributes {stable_mosaic.version = 11 : i64} {
  func.func @_dual_conv3x3_act_add_kernel(%arg0: i32, %arg1: memref<27x512xf32, #tpu.memory_space<vmem>>, %arg2: memref<32x27xf32, #tpu.memory_space<vmem>>, %arg3: memref<32x1xf32, #tpu.memory_space<vmem>>, %arg4: memref<16x512xf32, #tpu.memory_space<vmem>>) attributes {dimension_semantics = [#tpu.dimension_semantics<parallel>], iteration_bounds = array<i64: 1>, scalar_prefetch = 0 : i64, scratch_operands = 0 : i64, tpu.core_type = #tpu.core_type<tc>, window_params = [{transform_indices = @transform_0, window_bounds = array<i64: 27, 512>}, {pipeline_mode = #tpu.pipeline_mode<synchronous>, transform_indices = @transform_1, window_bounds = array<i64: 32, 27>}, {pipeline_mode = #tpu.pipeline_mode<synchronous>, transform_indices = @transform_2, window_bounds = array<i64: 32, 1>}, {transform_indices = @transform_3, window_bounds = array<i64: 16, 512>}]} {
    %c0 = arith.constant 0 : index
    %c0_0 = arith.constant 0 : index
    %0 = vector.load %arg2[%c0, %c0_0] : memref<32x27xf32, #tpu.memory_space<vmem>>, vector<32x27xf32>
    %c0_1 = arith.constant 0 : index
    %c0_2 = arith.constant 0 : index
    %1 = vector.load %arg1[%c0_1, %c0_2] : memref<27x512xf32, #tpu.memory_space<vmem>>, vector<27x512xf32>
    %cst = arith.constant dense<0.000000e+00> : vector<32x512xf32>
    %2 = tpu.matmul %0, %1, %cst {dimension_numbers = #tpu.dot_dimension_numbers<[1], [0], [0], [1], [0, 0, 1, 1], [], []>} : vector<32x27xf32>, vector<27x512xf32>, vector<32x512xf32> -> vector<32x512xf32>
    %c0_3 = arith.constant 0 : index
    %c0_4 = arith.constant 0 : index
    %3 = vector.load %arg3[%c0_3, %c0_4] : memref<32x1xf32, #tpu.memory_space<vmem>>, vector<32x1xf32>
    %4 = vector.broadcast %3 : vector<32x1xf32> to vector<32x512xf32>
    %5 = arith.addf %2, %4 : vector<32x512xf32>
    %6 = vector.extract_strided_slice %5 {offsets = [0, 0], sizes = [16, 512], strides = [1, 1]} : vector<32x512xf32> to vector<16x512xf32>
    %7 = vector.extract_strided_slice %5 {offsets = [16, 0], sizes = [16, 512], strides = [1, 1]} : vector<32x512xf32> to vector<16x512xf32>
    %cst_5 = arith.constant 0.000000e+00 : f32
    %cst_6 = arith.constant 6.000000e+00 : f32
    %8 = vector.broadcast %cst_5 : f32 to vector<16x512xf32>
    %9 = arith.maximumf %8, %6 : vector<16x512xf32>
    %10 = vector.broadcast %cst_6 : f32 to vector<16x512xf32>
    %11 = arith.minimumf %10, %9 : vector<16x512xf32>
    %cst_7 = arith.constant 0.000000e+00 : f32
    %12 = vector.broadcast %cst_7 : f32 to vector<16x512xf32>
    %13 = arith.subf %12, %7 : vector<16x512xf32>
    %14 = math.exp %13 : vector<16x512xf32>
    %cst_8 = arith.constant 1.000000e+00 : f32
    %15 = vector.broadcast %cst_8 : f32 to vector<16x512xf32>
    %16 = arith.addf %15, %14 : vector<16x512xf32>
    %cst_9 = arith.constant 1.000000e+00 : f32
    %17 = vector.broadcast %cst_9 : f32 to vector<16x512xf32>
    %18 = arith.divf %17, %16 : vector<16x512xf32>
    %19 = arith.addf %11, %18 : vector<16x512xf32>
    %c0_10 = arith.constant 0 : index
    %c0_11 = arith.constant 0 : index
    %20 = vector.load %arg4[%c0_10, %c0_11] : memref<16x512xf32, #tpu.memory_space<vmem>>, vector<16x512xf32>
    tpu.vector_store %arg4[%c0_10, %c0_11], %19 {strides = array<i32>} : memref<16x512xf32, #tpu.memory_space<vmem>>, vector<16x512xf32>,
    return
  }
  func.func @transform_0(%arg0: i32) -> (i32, i32) {
    %c0_i32 = arith.constant 0 : i32
    %c0_i32_0 = arith.constant 0 : i32
    return %c0_i32, %arg0 : i32, i32
  }
  func.func @transform_1(%arg0: i32) -> (i32, i32) {
    %c0_i32 = arith.constant 0 : i32
    %c0_i32_0 = arith.constant 0 : i32
    %c0_i32_1 = arith.constant 0 : i32
    return %c0_i32, %c0_i32_0 : i32, i32
  }
  func.func @transform_2(%arg0: i32) -> (i32, i32) {
    %c0_i32 = arith.constant 0 : i32
    %c0_i32_0 = arith.constant 0 : i32
    %c0_i32_1 = arith.constant 0 : i32
    return %c0_i32, %c0_i32_0 : i32, i32
  }
  func.func @transform_3(%arg0: i32) -> (i32, i32) {
    %c0_i32 = arith.constant 0 : i32
    %c0_i32_0 = arith.constant 0 : i32
    return %c0_i32, %arg0 : i32, i32
  }
}

</mosaic_0001>

<llo_original>
// kernel: testblock5_forward.1
$region0: #{testblock5_forward.1}
  #allocation0 [shape = 'u32[]', space=smem, size = 0x4, offset = 0x4, fixed_abs, tag = 'smem constant byte address 0x4 - core index']
  #allocation1 [shape = 'u32[72,128]{1,0:T(1,128)}', space=vmem, size = 0x9000, scoped, tag = 'internal scratch']
  %s0 = inlined_call_operand.vmem [shape: f32[27,512], index: 0, kind: input, shape index: {}]
  %s1 = inlined_call_operand.vmem [shape: f32[32,27], index: 1, kind: input, shape index: {}]
  %s2 = inlined_call_operand.vmem [shape: f32[32,1], index: 2, kind: input, shape index: {}]
  %s3 = inlined_call_operand.vmem [shape: f32[16,512], index: 3, kind: output, shape index: {}]
  %s4 = sld [smem:[#allocation0]]
  $region22: #{testblock5_forward.1} parent=0
    _
  %s6 = ssub.s32 1, %s4
  %s7 = scalar_select 0, %s6, %s4
  // Predicated region
  $region2: #{testblock5_forward.1} parent=0 // pred_check
    _
  $region3: #{testblock5_forward.1} parent=0 // pred_check_branch
    %9 = sbr.rel (0) target = $region5
  $region4: #{testblock5_forward.1} parent=0 // pred_region
    _
  $region5: #{testblock5_forward.1} parent=0 // pred_fallthru
    _
  // Predicated region
  $region6: #{testblock5_forward.1} parent=0 // pred_check
    _
  $region7: #{testblock5_forward.1} parent=0 // pred_check_branch
    %11 = sbr.rel (0) target = $region9
  $region8: #{testblock5_forward.1} parent=0 // pred_region
    _
  $region9: #{testblock5_forward.1} parent=0 // pred_fallthru
    _
  // Predicated region
  $region10: #{testblock5_forward.1} parent=0 // pred_check
    _
  $region11: #{testblock5_forward.1} parent=0 // pred_check_branch
    %13 = sbr.rel (0) target = $region13
  $region12: #{testblock5_forward.1} parent=0 // pred_region
    _
  $region13: #{testblock5_forward.1} parent=0 // pred_fallthru
    _
  %v14 = vld [vmem:[%s1] sm:$0xff]
  %v15 = vld [vmem:[%s1 + $0x8] sm:$0xff]
  %v16 = vld [vmem:[%s1 + $0x10] sm:$0xff]
  %v17 = vld [vmem:[%s1 + $0x18] sm:$0xff]
  %v18 = vld [vmem:[%s0] sm:$0xff]
  %v19 = vld [vmem:[%s0 + $0x8] sm:$0xff]
  %v20 = vld [vmem:[%s0 + $0x10] sm:$0xff]
  %v21 = vld [vmem:[%s0 + $0x18] sm:$0xff]
  %v22 = vld [vmem:[%s0 + $0x20] sm:$0xff]
  %v23 = vld [vmem:[%s0 + $0x28] sm:$0xff]
  %v24 = vld [vmem:[%s0 + $0x30] sm:$0xff]
  %v25 = vld [vmem:[%s0 + $0x38] sm:$0xff]
  %v26 = vld [vmem:[%s0 + $0x40] sm:$0xff]
  %v27 = vld [vmem:[%s0 + $0x48] sm:$0xff]
  %v28 = vld [vmem:[%s0 + $0x50] sm:$0xff]
  %v29 = vld [vmem:[%s0 + $0x58] sm:$0xff]
  %v30 = vld [vmem:[%s0 + $0x60] sm:$0x7]
  %v31 = vld [vmem:[%s0 + $0x68] sm:$0x7]
  %v32 = vld [vmem:[%s0 + $0x70] sm:$0x7]
  %v33 = vld [vmem:[%s0 + $0x78] sm:$0x7]
  %v34 = vld [vmem:[%s2] sm:$0xff]
  %v35 = vld [vmem:[%s2 + $0x8] sm:$0xff]
  %v36 = vld [vmem:[%s2 + $0x10] sm:$0xff]
  %v37 = vld [vmem:[%s2 + $0x18] sm:$0xff]
  %39 = vset.pattern.permute.xlu0 0
  %40 = vperm.xlu0 %39, %v34
  %v41 = vpop.permute.xlu0 %40
  %44 = vset.pattern.permute.xlu0 0
  %45 = vperm.xlu0 %44, %v35
  %v46 = vpop.permute.xlu0 %45
  %49 = vset.pattern.permute.xlu0 0
  %50 = vperm.xlu0 %49, %v36
  %v51 = vpop.permute.xlu0 %50
  %54 = vset.pattern.permute.xlu0 0
  %55 = vperm.xlu0 %54, %v37
  %v56 = vpop.permute.xlu0 %55
  %vm58 = vcmask 220160
  %v60 = vsel %vm58, %v14, 0
  %v63 = vsel %vm58, %v15, 0
  %v66 = vsel %vm58, %v16, 0
  %v69 = vsel %vm58, %v17, 0
  %vm71 = vcmask 1042432
  %v73 = vsel %vm71, %v30, 0
  %v76 = vsel %vm71, %v31, 0
  %v79 = vsel %vm71, %v32, 0
  %v82 = vsel %vm71, %v33, 0
  %84 = vmatpush.msra.mxu0 0.0
  %85 = vmatpush.msra.mxu0 0.0
  %86 = vmatpush.msra.mxu0 0.0
  %87 = vmatpush.msra.mxu0 0.0
  %88 = vmatpush.msra.mxu0 0.0
  %89 = vmatpush.msra.mxu0 0.0
  %90 = vmatpush.msra.mxu0 0.0
  %91 = vmatpush.msra.mxu0 0.0
  %92 = vmatpush.msra.mxu0 0.0
  %93 = vmatpush.msra.mxu0 0.0
  %94 = vmatpush.msra.mxu0 0.0
  %95 = vmatpush.msra.mxu0 0.0
  %96 = vmatpush.msra.mxu0 %v73
  %97 = vmatpush.msra.mxu0 %v26
  %98 = vmatpush.msra.mxu0 %v22
  %99 = vmatpush.msra.mxu0 %v18
  %100 = vmatmul.f32.gmra.mxu0 %v60
  %v101 = vpop.f32.mrf.mxu0
  %v102 = vadd.f32 %v41, %v101
  %103 = vmatmul.f32.gmra.mxu0 %v63
  %v104 = vpop.f32.mrf.mxu0
  %v105 = vadd.f32 %v46, %v104
  %106 = vmatmul.f32.gmra.mxu0 %v66
  %v107 = vpop.f32.mrf.mxu0
  %v108 = vadd.f32 %v51, %v107
  %109 = vmatmul.f32.gmra.mxu0 %v69
  %v110 = vpop.f32.mrf.mxu0
  %v111 = vadd.f32 %v56, %v110
  %112 = vdwg.mxu0
  %113 = vmatpush.msra.mxu0 0.0
  %114 = vmatpush.msra.mxu0 0.0
  %115 = vmatpush.msra.mxu0 0.0
  %116 = vmatpush.msra.mxu0 0.0
  %117 = vmatpush.msra.mxu0 0.0
  %118 = vmatpush.msra.mxu0 0.0
  %119 = vmatpush.msra.mxu0 0.0
  %120 = vmatpush.msra.mxu0 0.0
  %121 = vmatpush.msra.mxu0 0.0
  %122 = vmatpush.msra.mxu0 0.0
  %123 = vmatpush.msra.mxu0 0.0
  %124 = vmatpush.msra.mxu0 0.0
  %125 = vmatpush.msra.mxu0 %v76
  %126 = vmatpush.msra.mxu0 %v27
  %127 = vmatpush.msra.mxu0 %v23
  %128 = vmatpush.msra.mxu0 %v19
  %129 = vmatmul.f32.gmra.mxu0 %v60
  %v130 = vpop.f32.mrf.mxu0
  %v131 = vadd.f32 %v41, %v130
  %132 = vmatmul.f32.gmra.mxu0 %v63
  %v133 = vpop.f32.mrf.mxu0
  %v134 = vadd.f32 %v46, %v133
  %135 = vmatmul.f32.gmra.mxu0 %v66
  %v136 = vpop.f32.mrf.mxu0
  %v137 = vadd.f32 %v51, %v136
  %138 = vmatmul.f32.gmra.mxu0 %v69
  %v139 = vpop.f32.mrf.mxu0
  %v140 = vadd.f32 %v56, %v139
  %141 = vdwg.mxu0
  %142 = vmatpush.msra.mxu0 0.0
  %143 = vmatpush.msra.mxu0 0.0
  %144 = vmatpush.msra.mxu0 0.0
  %145 = vmatpush.msra.mxu0 0.0
  %146 = vmatpush.msra.mxu0 0.0
  %147 = vmatpush.msra.mxu0 0.0
  %148 = vmatpush.msra.mxu0 0.0
  %149 = vmatpush.msra.mxu0 0.0
  %150 = vmatpush.msra.mxu0 0.0
  %151 = vmatpush.msra.mxu0 0.0
  %152 = vmatpush.msra.mxu0 0.0
  %153 = vmatpush.msra.mxu0 0.0
  %154 = vmatpush.msra.mxu0 %v79
  %155 = vmatpush.msra.mxu0 %v28
  %156 = vmatpush.msra.mxu0 %v24
  %157 = vmatpush.msra.mxu0 %v20
  %158 = vmatmul.f32.gmra.mxu0 %v60
  %v159 = vpop.f32.mrf.mxu0
  %v160 = vadd.f32 %v41, %v159
  %161 = vmatmul.f32.gmra.mxu0 %v63
  %v162 = vpop.f32.mrf.mxu0
  %v163 = vadd.f32 %v46, %v162
  %164 = vmatmul.f32.gmra.mxu0 %v66
  %v165 = vpop.f32.mrf.mxu0
  %v166 = vadd.f32 %v51, %v165
  %167 = vmatmul.f32.gmra.mxu0 %v69
  %v168 = vpop.f32.mrf.mxu0
  %v169 = vadd.f32 %v56, %v168
  %170 = vdwg.mxu0
  %171 = vmatpush.msra.mxu0 0.0
  %172 = vmatpush.msra.mxu0 0.0
  %173 = vmatpush.msra.mxu0 0.0
  %174 = vmatpush.msra.mxu0 0.0
  %175 = vmatpush.msra.mxu0 0.0
  %176 = vmatpush.msra.mxu0 0.0
  %177 = vmatpush.msra.mxu0 0.0
  %178 = vmatpush.msra.mxu0 0.0
  %179 = vmatpush.msra.mxu0 0.0
  %180 = vmatpush.msra.mxu0 0.0
  %181 = vmatpush.msra.mxu0 0.0
  %182 = vmatpush.msra.mxu0 0.0
  %183 = vmatpush.msra.mxu0 %v82
  %184 = vmatpush.msra.mxu0 %v29
  %185 = vmatpush.msra.mxu0 %v25
  %186 = vmatpush.msra.mxu0 %v21
  %187 = vmatmul.f32.gmra.mxu0 %v60
  %v188 = vpop.f32.mrf.mxu0
  %v189 = vadd.f32 %v41, %v188
  %190 = vmatmul.f32.gmra.mxu0 %v63
  %v191 = vpop.f32.mrf.mxu0
  %v192 = vadd.f32 %v46, %v191
  %193 = vmatmul.f32.gmra.mxu0 %v66
  %v194 = vpop.f32.mrf.mxu0
  %v195 = vadd.f32 %v51, %v194
  %196 = vmatmul.f32.gmra.mxu0 %v69
  %v197 = vpop.f32.mrf.mxu0
  %v198 = vadd.f32 %v56, %v197
  %199 = vdwg.mxu0
  %v200 = vmax.f32 %v102, 0.0
  %v201 = vmax.f32 %v131, 0.0
  %v202 = vmax.f32 %v160, 0.0
  %v203 = vmax.f32 %v189, 0.0
  %v204 = vmax.f32 %v105, 0.0
  %v205 = vmax.f32 %v134, 0.0
  %v206 = vmax.f32 %v163, 0.0
  %v207 = vmax.f32 %v192, 0.0
  %v208 = vmin.f32 %v200, 6.0
  %v209 = vmin.f32 %v201, 6.0
  %v210 = vmin.f32 %v202, 6.0
  %v211 = vmin.f32 %v203, 6.0
  %v212 = vmin.f32 %v204, 6.0
  %v213 = vmin.f32 %v205, 6.0
  %v214 = vmin.f32 %v206, 6.0
  %v215 = vmin.f32 %v207, 6.0
  %v216 = vsub.f32 0.0, %v108
  %v217 = vsub.f32 0.0, %v137
  %v218 = vsub.f32 0.0, %v166
  %v219 = vsub.f32 0.0, %v195
  %v220 = vsub.f32 0.0, %v111
  %v221 = vsub.f32 0.0, %v140
  %v222 = vsub.f32 0.0, %v169
  %v223 = vsub.f32 0.0, %v198
  %v224 = vmul.f32 %v216, 1.442695
  %v225 = vpow.pop %v224
  %v226 = vmul.f32 %v217, 1.442695
  %v227 = vpow.pop %v226
  %v228 = vmul.f32 %v218, 1.442695
  %v229 = vpow.pop %v228
  %v230 = vmul.f32 %v219, 1.442695
  %v231 = vpow.pop %v230
  %v232 = vmul.f32 %v220, 1.442695
  %v233 = vpow.pop %v232
  %v234 = vmul.f32 %v221, 1.442695
  %v235 = vpow.pop %v234
  %v236 = vmul.f32 %v222, 1.442695
  %v237 = vpow.pop %v236
  %v238 = vmul.f32 %v223, 1.442695
  %v239 = vpow.pop %v238
  %v240 = vadd.f32 %v225, 1.0
  %v241 = vadd.f32 %v227, 1.0
  %v242 = vadd.f32 %v229, 1.0
  %v243 = vadd.f32 %v231, 1.0
  %v244 = vadd.f32 %v233, 1.0
  %v245 = vadd.f32 %v235, 1.0
  %v246 = vadd.f32 %v237, 1.0
  %v247 = vadd.f32 %v239, 1.0
  %v248 = vrcp.pop %v240
  %v249 = vmul.f32 %v240, %v248
  %v250 = vsub.f32 1.0, %v249
  %v251 = vmul.f32 %v248, %v250
  %v252 = vadd.f32 %v248, %v251
  %vm253 = vweird.f32 %v240
  %vm254 = vweird.f32 %v248
  %vm255 = vmor %vm253, %vm254
  %v256 = vsel %vm255, %v248, %v252
  %v257 = vand.u32 2147483647, %v240
  %vm258 = vcmp.eq.f32.partialorder %v257, 8.507059e+37
  %v259 = vand.u32 %v240, 2147483648
  %v260 = vor.u32 1.1754944e-38, %v259
  %v261 = vsel %vm258, %v260, %v256
  %v262 = vmul.f32 1.0, %v261
  %v263 = vrcp.pop %v241
  %v264 = vmul.f32 %v241, %v263
  %v265 = vsub.f32 1.0, %v264
  %v266 = vmul.f32 %v263, %v265
  %v267 = vadd.f32 %v263, %v266
  %vm268 = vweird.f32 %v241
  %vm269 = vweird.f32 %v263
  %vm270 = vmor %vm268, %vm269
  %v271 = vsel %vm270, %v263, %v267
  %v272 = vand.u32 2147483647, %v241
  %vm273 = vcmp.eq.f32.partialorder %v272, 8.507059e+37
  %v274 = vand.u32 %v241, 2147483648
  %v275 = vor.u32 1.1754944e-38, %v274
  %v276 = vsel %vm273, %v275, %v271
  %v277 = vmul.f32 1.0, %v276
  %v278 = vrcp.pop %v242
  %v279 = vmul.f32 %v242, %v278
  %v280 = vsub.f32 1.0, %v279
  %v281 = vmul.f32 %v278, %v280
  %v282 = vadd.f32 %v278, %v281
  %vm283 = vweird.f32 %v242
  %vm284 = vweird.f32 %v278
  %vm285 = vmor %vm283, %vm284
  %v286 = vsel %vm285, %v278, %v282
  %v287 = vand.u32 2147483647, %v242
  %vm288 = vcmp.eq.f32.partialorder %v287, 8.507059e+37
  %v289 = vand.u32 %v242, 2147483648
  %v290 = vor.u32 1.1754944e-38, %v289
  %v291 = vsel %vm288, %v290, %v286
  %v292 = vmul.f32 1.0, %v291
  %v293 = vrcp.pop %v243
  %v294 = vmul.f32 %v243, %v293
  %v295 = vsub.f32 1.0, %v294
  %v296 = vmul.f32 %v293, %v295
  %v297 = vadd.f32 %v293, %v296
  %vm298 = vweird.f32 %v243
  %vm299 = vweird.f32 %v293
  %vm300 = vmor %vm298, %vm299
  %v301 = vsel %vm300, %v293, %v297
  %v302 = vand.u32 2147483647, %v243
  %vm303 = vcmp.eq.f32.partialorder %v302, 8.507059e+37
  %v304 = vand.u32 %v243, 2147483648
  %v305 = vor.u32 1.1754944e-38, %v304
  %v306 = vsel %vm303, %v305, %v301
  %v307 = vmul.f32 1.0, %v306
  %v308 = vrcp.pop %v244
  %v309 = vmul.f32 %v244, %v308
  %v310 = vsub.f32 1.0, %v309
  %v311 = vmul.f32 %v308, %v310
  %v312 = vadd.f32 %v308, %v311
  %vm313 = vweird.f32 %v244
  %vm314 = vweird.f32 %v308
  %vm315 = vmor %vm313, %vm314
  %v316 = vsel %vm315, %v308, %v312
  %v317 = vand.u32 2147483647, %v244
  %vm318 = vcmp.eq.f32.partialorder %v317, 8.507059e+37
  %v319 = vand.u32 %v244, 2147483648
  %v320 = vor.u32 1.1754944e-38, %v319
  %v321 = vsel %vm318, %v320, %v316
  %v322 = vmul.f32 1.0, %v321
  %v323 = vrcp.pop %v245
  %v324 = vmul.f32 %v245, %v323
  %v325 = vsub.f32 1.0, %v324
  %v326 = vmul.f32 %v323, %v325
  %v327 = vadd.f32 %v323, %v326
  %vm328 = vweird.f32 %v245
  %vm329 = vweird.f32 %v323
  %vm330 = vmor %vm328, %vm329
  %v331 = vsel %vm330, %v323, %v327
  %v332 = vand.u32 2147483647, %v245
  %vm333 = vcmp.eq.f32.partialorder %v332, 8.507059e+37
  %v334 = vand.u32 %v245, 2147483648
  %v335 = vor.u32 1.1754944e-38, %v334
  %v336 = vsel %vm333, %v335, %v331
  %v337 = vmul.f32 1.0, %v336
  %v338 = vrcp.pop %v246
  %v339 = vmul.f32 %v246, %v338
  %v340 = vsub.f32 1.0, %v339
  %v341 = vmul.f32 %v338, %v340
  %v342 = vadd.f32 %v338, %v341
  %vm343 = vweird.f32 %v246
  %vm344 = vweird.f32 %v338
  %vm345 = vmor %vm343, %vm344
  %v346 = vsel %vm345, %v338, %v342
  %v347 = vand.u32 2147483647, %v246
  %vm348 = vcmp.eq.f32.partialorder %v347, 8.507059e+37
  %v349 = vand.u32 %v246, 2147483648
  %v350 = vor.u32 1.1754944e-38, %v349
  %v351 = vsel %vm348, %v350, %v346
  %v352 = vmul.f32 1.0, %v351
  %v353 = vrcp.pop %v247
  %v354 = vmul.f32 %v247, %v353
  %v355 = vsub.f32 1.0, %v354
  %v356 = vmul.f32 %v353, %v355
  %v357 = vadd.f32 %v353, %v356
  %vm358 = vweird.f32 %v247
  %vm359 = vweird.f32 %v353
  %vm360 = vmor %vm358, %vm359
  %v361 = vsel %vm360, %v353, %v357
  %v362 = vand.u32 2147483647, %v247
  %vm363 = vcmp.eq.f32.partialorder %v362, 8.507059e+37
  %v364 = vand.u32 %v247, 2147483648
  %v365 = vor.u32 1.1754944e-38, %v364
  %v366 = vsel %vm363, %v365, %v361
  %v367 = vmul.f32 1.0, %v366
  %v368 = vadd.f32 %v208, %v262
  %v369 = vadd.f32 %v209, %v277
  %v370 = vadd.f32 %v210, %v292
  %v371 = vadd.f32 %v211, %v307
  %v372 = vadd.f32 %v212, %v322
  %v373 = vadd.f32 %v213, %v337
  %v374 = vadd.f32 %v214, %v352
  %v375 = vadd.f32 %v215, %v367
  %376 = vst [vmem:[%s3] sm:$0xff] %v368
  %377 = vst [vmem:[%s3 + $0x8] sm:$0xff] %v369
  %378 = vst [vmem:[%s3 + $0x10] sm:$0xff] %v370
  %379 = vst [vmem:[%s3 + $0x18] sm:$0xff] %v371
  %380 = vst [vmem:[%s3 + $0x20] sm:$0xff] %v372
  %381 = vst [vmem:[%s3 + $0x28] sm:$0xff] %v373
  %382 = vst [vmem:[%s3 + $0x30] sm:$0xff] %v374
  %383 = vst [vmem:[%s3 + $0x38] sm:$0xff] %v375
  // Predicated region
  $region14: #{testblock5_forward.1} parent=0 // pred_check
    _
  $region15: #{testblock5_forward.1} parent=0 // pred_check_branch
    %385 = sbr.rel (0) target = $region17
  $region16: #{testblock5_forward.1} parent=0 // pred_region
    _
  $region17: #{testblock5_forward.1} parent=0 // pred_fallthru
    _
  // Predicated region
  $region18: #{testblock5_forward.1} parent=0 // pred_check
    _
  $region19: #{testblock5_forward.1} parent=0 // pred_check_branch
    %387 = sbr.rel (0) target = $region21
  $region20: #{testblock5_forward.1} parent=0 // pred_region
    _
  $region21: #{testblock5_forward.1} parent=0 // pred_fallthru
    _

</llo_original>
